<compile_context>
chip_gen: v5e
topology: v5e:2x2
jax: 0.10.0
libtpu: 0.0.40
codegen_flags: <defaults>
</compile_context>

<pallas_src>
import jax
import jax.numpy as jnp
from jax.experimental import pallas as pl
from jax.experimental.pallas import tpu as pltpu


def _copy_kernel(x_ref, o_ref):
    # Whole-tile copy: one VMEM tile in, same tile out.
    o_ref[...] = x_ref[...]


def _choose_slab(total_elems):
    """Pick a lane-dense (rows, lanes) layout for `total_elems` elements.

    Prefers lanes in {2048..128} (multiples of 128) with rows a multiple of 8
    so blocks are fully (8,128)-aligned; falls back to any 128-multiple lane
    width; returns None if the element count is not divisible by 128.
    """
    for lanes in (2048, 1024, 512, 256, 128):
        if total_elems % lanes == 0 and (total_elems // lanes) % 8 == 0:
            return total_elems // lanes, lanes
    for lanes in (2048, 1024, 512, 256, 128):
        if total_elems % lanes == 0:
            return total_elems // lanes, lanes
    return None


def pallas_encoder_forward(x_nchw: jax.Array) -> jax.Array:
    """Concrete (identity) realization of Encoder.forward via a Pallas kernel.

    Args:
      x_nchw: float array of shape (N, C, H, W).
    Returns:
      Array of identical shape/dtype (get_output_shape() == input shape).
    """
    N, C, H, W = x_nchw.shape
    total = N * C * H * W
    slab = _choose_slab(total)

    if slab is None:
        # Odd sizes: single full-array block (block == array shape lifts the
        # (8,128) divisibility constraint), no grid — one DMA in, one out.
        x2d = x_nchw.reshape(N * C, H * W)
        out2d = pl.pallas_call(
            _copy_kernel,
            out_shape=jax.ShapeDtypeStruct(x2d.shape, x2d.dtype),
        )(x2d)
        return out2d.reshape(N, C, H, W)

    rows, lanes = slab
    x2d = x_nchw.reshape(rows, lanes)

    # Row tile: largest multiple of 8 keeping one block <= ~4 MiB, and an
    # exact divisor of rows (rows is a multiple of 8 on this path) so no
    # partial/padded blocks are generated.
    itemsize = jnp.dtype(x2d.dtype).itemsize
    max_block_bytes = 4 * 1024 * 1024
    tr = max(8, (max_block_bytes // (lanes * itemsize)) // 8 * 8)
    tr = min(tr, rows)
    while rows % tr != 0:
        tr -= 8
    grid = (rows // tr,)

    out2d = pl.pallas_call(
        _copy_kernel,
        out_shape=jax.ShapeDtypeStruct((rows, lanes), x2d.dtype),
        grid_spec=pl.GridSpec(
            grid=grid,
            in_specs=[pl.BlockSpec((tr, lanes), lambda i: (i, 0))],
            out_specs=pl.BlockSpec((tr, lanes), lambda i: (i, 0)),
        ),
        compiler_params=pltpu.CompilerParams(
            dimension_semantics=("parallel",),
            vmem_limit_bytes=32 * 1024 * 1024,
        ),
    )(x2d)

    return out2d.reshape(N, C, H, W)


def get_output_shape(input_shape):
    """Interface method: identity encoder preserves the input shape."""
    return tuple(input_shape)


if __name__ == "__main__":
    key = jax.random.PRNGKey(0)
    # Small NCHW input consistent with a typical encoder: batch=2, channels=4,
    # spatial=16x16.  Flattens to an (8, 256) lane-dense slab -> single
    # (8,128)-aligned block, single grid step.
    x = jax.random.normal(key, (2, 4, 16, 16), dtype=jnp.float32)

    y = pallas_encoder_forward(x)
    y = jax.block_until_ready(y)

    # Contract checks: output shape matches get_output_shape(), values match
    # the (identity) forward semantics.
    assert y.shape == get_output_shape(x.shape), (y.shape, x.shape)
    assert y.dtype == x.dtype
    assert bool(jnp.allclose(y, x)), "identity encoder mismatch"

    print("KERNEL_OK")
</pallas_src>

<mosaic_0001>
module attributes {stable_mosaic.version = 11 : i64} {
  func.func @_copy_kernel(%arg0: i32, %arg1: memref<8x256xf32, #tpu.memory_space<vmem>>, %arg2: memref<8x256xf32, #tpu.memory_space<vmem>>) attributes {dimension_semantics = [#tpu.dimension_semantics<parallel>], iteration_bounds = array<i64: 1>, scalar_prefetch = 0 : i64, scratch_operands = 0 : i64, tpu.core_type = #tpu.core_type<tc>, window_params = [{transform_indices = @transform_0, window_bounds = array<i64: 8, 256>}, {transform_indices = @transform_1, window_bounds = array<i64: 8, 256>}]} {
    %c0 = arith.constant 0 : index
    %c0_0 = arith.constant 0 : index
    %0 = vector.load %arg1[%c0, %c0_0] : memref<8x256xf32, #tpu.memory_space<vmem>>, vector<8x256xf32>
    %c0_1 = arith.constant 0 : index
    %c0_2 = arith.constant 0 : index
    %1 = vector.load %arg2[%c0_1, %c0_2] : memref<8x256xf32, #tpu.memory_space<vmem>>, vector<8x256xf32>
    tpu.vector_store %arg2[%c0_1, %c0_2], %0 {strides = array<i32>} : memref<8x256xf32, #tpu.memory_space<vmem>>, vector<8x256xf32>,
    return
  }
  func.func @transform_0(%arg0: i32) -> (i32, i32) {
    %c0_i32 = arith.constant 0 : i32
    %c0_i32_0 = arith.constant 0 : i32
    return %arg0, %c0_i32 : i32, i32
  }
  func.func @transform_1(%arg0: i32) -> (i32, i32) {
    %c0_i32 = arith.constant 0 : i32
    %c0_i32_0 = arith.constant 0 : i32
    return %arg0, %c0_i32 : i32, i32
  }
}

</mosaic_0001>

<llo_original>
// kernel: tpu_custom_call.1
$region0: #{tpu_custom_call.1}
  #allocation0 [shape = 'u32[]', space=smem, size = 0x4, offset = 0x4, fixed_abs, tag = 'smem constant byte address 0x4 - core index']
  #allocation1 [shape = 'u32[72,128]{1,0:T(1,128)}', space=vmem, size = 0x9000, scoped, tag = 'internal scratch']
  %s0 = inlined_call_operand.hbm [shape: f32[8,256], index: 0, kind: input, shape index: {}]
  %s1 = inlined_call_operand.hbm [shape: f32[8,256], index: 1, kind: output, shape index: {}]
  %s2 = sld [smem:[#allocation0]]
  $region18: #{tpu_custom_call.1} parent=0
    _
  %s4 = ssub.s32 1, %s2
  %s5 = scalar_select 0, %s4, %s2
  $region1: #{tpu_custom_call.1} parent=0
    #allocation2 [shape = 'u8[8192]{0}', space=vmem, size = 0x2000, scoped, tag = 'input window, operand 0, single buffered']
    #allocation3 [shape = 's32[1]{0}', space=sflag, size = 0x4, scoped, tag = 'scoped memory for tpu_custom_call.1']
    #allocation4 [shape = 's32[1]{0}', space=sflag, size = 0x4, scoped, tag = 'scoped memory for tpu_custom_call.1']
    #allocation5 [shape = 'u8[8192]{0}', space=vmem, size = 0x2000, scoped, tag = 'output window, operand 0, single buffered']
    %6 = vsyncpa [#allocation3], 0
    %7 = vsyncpa [#allocation4], 0
    // Predicated region
    $region2: #{tpu_custom_call.1} parent=1 // pred_check
      _
    $region3: #{tpu_custom_call.1} parent=1 // pred_check_branch
      %9 = sbr.rel (0) target = $region5
    $region4: #{tpu_custom_call.1} parent=1 // pred_region
      %11 = vsyncadd [#allocation3], 0
      %s13 = sshll.u32 %s0, 4
      %s14 = int_to_ptr.hbm [resolvable:$true] %s13
      %s15 = sshll.u32 [#allocation2], 4
      %s16 = int_to_ptr.vmem [resolvable:$true] %s15
      %18 = dma.hbm_to_vmem [thread:$0]  %s14, 256, %s16, [#allocation3]
    $region5: #{tpu_custom_call.1} parent=1 // pred_fallthru
      _
    // Predicated region
    $region6: #{tpu_custom_call.1} parent=1 // pred_check
      _
    $region7: #{tpu_custom_call.1} parent=1 // pred_check_branch
      %20 = sbr.rel (0) target = $region9
    $region8: #{tpu_custom_call.1} parent=1 // pred_region
      %22 = dma.done [#allocation3], 256
    $region9: #{tpu_custom_call.1} parent=1 // pred_fallthru
      _
    %v23 = vld [vmem:[#allocation2] sm:$0xff]
    %v24 = vld [vmem:[#allocation2 + $0x8] sm:$0xff]
    %25 = vst [vmem:[#allocation5] sm:$0xff] %v23
    %26 = vst [vmem:[#allocation5 + $0x8] sm:$0xff] %v24
    // Predicated region
    $region10: #{tpu_custom_call.1} parent=1 // pred_check
      _
    $region11: #{tpu_custom_call.1} parent=1 // pred_check_branch
      %28 = sbr.rel (0) target = $region13
    $region12: #{tpu_custom_call.1} parent=1 // pred_region
      %30 = vsyncadd [#allocation4], 0
      %s32 = sshll.u32 [#allocation5], 4
      %s33 = int_to_ptr.vmem [resolvable:$true] %s32
      %s34 = sshll.u32 %s1, 4
      %s35 = int_to_ptr.hbm [resolvable:$true] %s34
      %37 = dma.vmem_to_hbm [thread:$0]  %s33, 256, %s35, [#allocation4]
    $region13: #{tpu_custom_call.1} parent=1 // pred_fallthru
      _
    // Predicated region
    $region14: #{tpu_custom_call.1} parent=1 // pred_check
      _
    $region15: #{tpu_custom_call.1} parent=1 // pred_check_branch
      %39 = sbr.rel (0) target = $region17
    $region16: #{tpu_custom_call.1} parent=1 // pred_region
      %41 = dma.done [#allocation4], 256
    $region17: #{tpu_custom_call.1} parent=1 // pred_fallthru
      _
    %42 = vsyncpa [#allocation3], 1
    %43 = vsyncpa [#allocation4], 1

</llo_original>
